<compile_context>
chip_gen: v5e
topology: v5e:2x2
jax: 0.10.0
libtpu: 0.0.40
codegen_flags: <defaults>
</compile_context>

<pallas_src>
import functools
import math

import numpy as np

import jax
import jax.numpy as jnp
from jax.experimental import pallas as pl
from jax.experimental.pallas import tpu as pltpu


def _group_sum_kernel(x_ref, sel_ref, o_ref, acc_ref, *, inv_tau: float):
    # Zero the resident accumulator at the first D-chunk.
    @pl.when(pl.program_id(1) == 0)
    def _():
        acc_ref[...] = jnp.zeros_like(acc_ref)

    # Grouped reduction as a skinny MXU matmul: (bb, td) @ (td, k) -> (bb, k),
    # accumulated in f32 inside the MXU (no explicit f32 upcast of x).
    acc_ref[...] += jnp.dot(
        x_ref[...], sel_ref[...], preferred_element_type=jnp.float32
    )

    # Finalize: scale by 1/tau in f32 and cast to the output dtype.
    @pl.when(pl.program_id(1) == pl.num_programs(1) - 1)
    def _():
        o_ref[...] = (acc_ref[...] * inv_tau).astype(o_ref.dtype)


def _choose_tiles(n: int, d: int, dtype_bytes: int):
    """Pick (batch_tile, feature_tile) so one x block is ~4 MiB.

    ~4 MiB per block -> ~8 MiB double-buffered, well inside the 32 MiB scoped
    VMEM limit on all of v5e / v6e / v7x, and large enough to amortize the
    ~0.35 us/step pipeline overhead (HBM-roofline plateau).
    """
    row_align = max(8, 32 // dtype_bytes)  # 8 for f32, 16 for bf16, 32 for int8
    target_bytes = 4 * 1024 * 1024

    # Feature-axis tile: full D unless even `row_align` rows of full D blow the
    # budget; then halve (stays an exact divisor of D, multiple of 128).
    td = d
    while td * dtype_bytes * row_align > target_bytes and td % 256 == 0:
        td //= 2

    # Batch-axis tile: as many rows as fit the budget, aligned to sublanes.
    bb_cap = max(row_align, (target_bytes // (td * dtype_bytes)) // row_align * row_align)
    bb = n if n <= bb_cap else bb_cap  # block == full dim is always legal
    return bb, td


def group_sum(x: jax.Array, k: int, tau: float = 1.0,
              *, block_rows: int | None = None,
              block_cols: int | None = None) -> jax.Array:
    """Pallas implementation of GroupSum.forward for dense tensors."""
    assert x.shape[-1] % k == 0, "last dim must be divisible by k"
    *lead, d = x.shape
    n = math.prod(lead) if lead else 1
    x2 = x.reshape(n, d)
    g = d // k

    dtype_bytes = jnp.dtype(x.dtype).itemsize
    bb, td = _choose_tiles(n, d, dtype_bytes)
    if block_rows is not None:
        bb = block_rows
    if block_cols is not None:
        td = block_cols
    assert d % td == 0, "feature tile must divide D"

    # Grid: batch tiles ("parallel" -> megacore sharding on v7x) x D chunks
    # ("arbitrary", last -> reduction axis with a resident output block).
    grid = (pl.cdiv(n, bb), d // td)

    # Block-diagonal group-selector matrix (D, k): entry (c, j) = 1 iff
    # feature column c belongs to group j.  Built once at trace time.
    sel = jnp.asarray(
        (np.arange(d)[:, None] // g == np.arange(k)[None, :]).astype(np.float32),
        dtype=x.dtype,
    )

    kernel = functools.partial(_group_sum_kernel, inv_tau=float(1.0 / tau))

    out2 = pl.pallas_call(
        kernel,
        out_shape=jax.ShapeDtypeStruct((n, k), x.dtype),
        grid_spec=pltpu.PrefetchScalarGridSpec(
            num_scalar_prefetch=0,
            grid=grid,
            in_specs=[
                pl.BlockSpec((bb, td), lambda i, j: (i, j)),   # x tile
                pl.BlockSpec((td, k), lambda i, j: (j, 0)),    # selector slice
            ],
            # Output block revisited across the D axis (accumulator pattern).
            out_specs=pl.BlockSpec((bb, k), lambda i, j: (i, 0)),
            scratch_shapes=[pltpu.VMEM((bb, k), jnp.float32)],
        ),
        compiler_params=pltpu.CompilerParams(
            dimension_semantics=("parallel", "arbitrary"),
            vmem_limit_bytes=32 * 1024 * 1024,
        ),
    )(x2, sel)

    return out2.reshape(*lead, k)


def _reference_group_sum(x, k, tau):
    *lead, d = x.shape
    return jnp.sum(x.reshape(*lead, k, d // k), axis=-1) / tau


if __name__ == "__main__":
    key = jax.random.PRNGKey(0)
    k1, k2, k3 = jax.random.split(key, 3)

    # 1) Basic (batch, features) case, auto tiling.
    batch, d, k, tau = 8, 256, 16, 2.0
    x = jax.random.normal(k1, (batch, d), dtype=jnp.float32)
    out = jax.block_until_ready(group_sum(x, k=k, tau=tau))
    ref = _reference_group_sum(x, k, tau)
    assert out.shape == (batch, k), out.shape
    assert jnp.allclose(out, ref, atol=1e-5, rtol=1e-5), "mismatch (case 1)"

    # 2) Multi-dim leading axes.
    x2 = jax.random.normal(k2, (2, 3, 128), dtype=jnp.float32)
    out2 = jax.block_until_ready(group_sum(x2, k=8, tau=1.0))
    ref2 = _reference_group_sum(x2, 8, 1.0)
    assert out2.shape == (2, 3, 8), out2.shape
    assert jnp.allclose(out2, ref2, atol=1e-5, rtol=1e-5), "mismatch (case 2)"

    # 3) Exercise batch tiling with a ragged last block AND the D-chunk
    #    accumulator path (grid = (3, 2)).
    x3 = jax.random.normal(k3, (20, 256), dtype=jnp.float32)
    out3 = jax.block_until_ready(
        group_sum(x3, k=16, tau=3.0, block_rows=8, block_cols=128))
    ref3 = _reference_group_sum(x3, 16, 3.0)
    assert out3.shape == (20, 16), out3.shape
    assert jnp.allclose(out3, ref3, atol=1e-5, rtol=1e-5), "mismatch (case 3)"

    print("KERNEL_OK")
</pallas_src>

<mosaic_0001>
module attributes {stable_mosaic.version = 11 : i64} {
  func.func @_group_sum_kernel(%arg0: i32, %arg1: i32, %arg2: memref<8x256xf32, #tpu.memory_space<vmem>>, %arg3: memref<256x16xf32, #tpu.memory_space<vmem>>, %arg4: memref<8x16xf32, #tpu.memory_space<vmem>>, %arg5: memref<8x16xf32, #tpu.memory_space<vmem>>) attributes {dimension_semantics = [#tpu.dimension_semantics<parallel>, #tpu.dimension_semantics<arbitrary>], iteration_bounds = array<i64: 1, 1>, scalar_prefetch = 0 : i64, scratch_operands = 1 : i64, tpu.core_type = #tpu.core_type<tc>, window_params = [{transform_indices = @transform_0, window_bounds = array<i64: 8, 256>}, {transform_indices = @transform_1, window_bounds = array<i64: 256, 16>}, {transform_indices = @transform_2, window_bounds = array<i64: 8, 16>}]} {
    %c0_i32 = arith.constant 0 : i32
    %0 = arith.cmpi eq, %arg1, %c0_i32 : i32
    %1 = arith.extui %0 : i1 to i32
    %c0_i32_0 = arith.constant 0 : i32
    %2 = arith.cmpi ne, %1, %c0_i32_0 : i32
    scf.if %2 {
      %cst_10 = arith.constant 0.000000e+00 : f32
      %12 = vector.broadcast %cst_10 : f32 to vector<8x16xf32>
      %c0_11 = arith.constant 0 : index
      %c0_12 = arith.constant 0 : index
      %13 = vector.load %arg5[%c0_11, %c0_12] : memref<8x16xf32, #tpu.memory_space<vmem>>, vector<8x16xf32>
      tpu.vector_store %arg5[%c0_11, %c0_12], %12 {strides = array<i32>} : memref<8x16xf32, #tpu.memory_space<vmem>>, vector<8x16xf32>,
    } else {
    }
    %c0 = arith.constant 0 : index
    %c0_1 = arith.constant 0 : index
    %3 = vector.load %arg5[%c0, %c0_1] : memref<8x16xf32, #tpu.memory_space<vmem>>, vector<8x16xf32>
    %c0_2 = arith.constant 0 : index
    %c0_3 = arith.constant 0 : index
    %4 = vector.load %arg2[%c0_2, %c0_3] : memref<8x256xf32, #tpu.memory_space<vmem>>, vector<8x256xf32>
    %c0_4 = arith.constant 0 : index
    %c0_5 = arith.constant 0 : index
    %5 = vector.load %arg3[%c0_4, %c0_5] : memref<256x16xf32, #tpu.memory_space<vmem>>, vector<256x16xf32>
    %cst = arith.constant dense<0.000000e+00> : vector<8x16xf32>
    %6 = tpu.matmul %4, %5, %cst {dimension_numbers = #tpu.dot_dimension_numbers<[1], [0], [0], [1], [0, 0, 1, 1], [], []>} : vector<8x256xf32>, vector<256x16xf32>, vector<8x16xf32> -> vector<8x16xf32>
    %7 = arith.addf %3, %6 : vector<8x16xf32>
    %c0_6 = arith.constant 0 : index
    %c0_7 = arith.constant 0 : index
    %8 = vector.load %arg5[%c0_6, %c0_7] : memref<8x16xf32, #tpu.memory_space<vmem>>, vector<8x16xf32>
    tpu.vector_store %arg5[%c0_6, %c0_7], %7 {strides = array<i32>} : memref<8x16xf32, #tpu.memory_space<vmem>>, vector<8x16xf32>,
    %c0_i32_8 = arith.constant 0 : i32
    %9 = arith.cmpi eq, %arg1, %c0_i32_8 : i32
    %10 = arith.extui %9 : i1 to i32
    %c0_i32_9 = arith.constant 0 : i32
    %11 = arith.cmpi ne, %10, %c0_i32_9 : i32
    scf.if %11 {
      %c0_10 = arith.constant 0 : index
      %c0_11 = arith.constant 0 : index
      %12 = vector.load %arg5[%c0_10, %c0_11] : memref<8x16xf32, #tpu.memory_space<vmem>>, vector<8x16xf32>
      %cst_12 = arith.constant 5.000000e-01 : f32
      %13 = vector.broadcast %cst_12 : f32 to vector<8x16xf32>
      %14 = arith.mulf %12, %13 : vector<8x16xf32>
      %c0_13 = arith.constant 0 : index
      %c0_14 = arith.constant 0 : index
      %15 = vector.load %arg4[%c0_13, %c0_14] : memref<8x16xf32, #tpu.memory_space<vmem>>, vector<8x16xf32>
      tpu.vector_store %arg4[%c0_13, %c0_14], %14 {strides = array<i32>} : memref<8x16xf32, #tpu.memory_space<vmem>>, vector<8x16xf32>,
    } else {
    }
    return
  }
  func.func @transform_0(%arg0: i32, %arg1: i32) -> (i32, i32) {
    %c0_i32 = arith.constant 0 : i32
    return %arg0, %arg1 : i32, i32
  }
  func.func @transform_1(%arg0: i32, %arg1: i32) -> (i32, i32) {
    %c0_i32 = arith.constant 0 : i32
    %c0_i32_0 = arith.constant 0 : i32
    return %arg1, %c0_i32 : i32, i32
  }
  func.func @transform_2(%arg0: i32, %arg1: i32) -> (i32, i32) {
    %c0_i32 = arith.constant 0 : i32
    %c0_i32_0 = arith.constant 0 : i32
    return %arg0, %c0_i32 : i32, i32
  }
}

</mosaic_0001>

<llo_original>
// kernel: tpu_custom_call.1
$region0: #{tpu_custom_call.1}
  #allocation0 [shape = 'u32[]', space=smem, size = 0x4, offset = 0x4, fixed_abs, tag = 'smem constant byte address 0x4 - core index']
  #allocation1 [shape = 'u32[72,128]{1,0:T(1,128)}', space=vmem, size = 0x9000, scoped, tag = 'internal scratch']
  #allocation2 [shape = 'f32[8,16]{1,0:T(8,128)}', space=vmem, size = 0x1000, scoped, tag = 'scratch operand']
  %s0 = inlined_call_operand.vmem [shape: f32[8,256], index: 0, kind: input, shape index: {}]
  %s1 = inlined_call_operand.vmem [shape: f32[256,16], index: 1, kind: input, shape index: {}]
  %s2 = inlined_call_operand.hbm [shape: f32[8,16], index: 2, kind: output, shape index: {}]
  %s3 = sld [smem:[#allocation0]]
  $region26: #{tpu_custom_call.1} parent=0
    _
  %s5 = ssub.s32 1, %s3
  %s6 = scalar_select 0, %s5, %s3
  $region1: #{tpu_custom_call.1} parent=0
    #allocation3 [shape = 'u8[4096]{0}', space=vmem, size = 0x1000, scoped, tag = 'output window, operand 0, single buffered']
    #allocation4 [shape = 's32[1]{0}', space=sflag, size = 0x4, scoped, tag = 'scoped memory for tpu_custom_call.1']
    %7 = vsyncpa [#allocation4], 0
    // Predicated region
    $region2: #{tpu_custom_call.1} parent=1 // pred_check
      _
    $region3: #{tpu_custom_call.1} parent=1 // pred_check_branch
      %9 = sbr.rel (0) target = $region5
    $region4: #{tpu_custom_call.1} parent=1 // pred_region
      _
    $region5: #{tpu_custom_call.1} parent=1 // pred_fallthru
      _
    // Predicated region
    $region6: #{tpu_custom_call.1} parent=1 // pred_check
      _
    $region7: #{tpu_custom_call.1} parent=1 // pred_check_branch
      %11 = sbr.rel (0) target = $region9
    $region8: #{tpu_custom_call.1} parent=1 // pred_region
      _
    $region9: #{tpu_custom_call.1} parent=1 // pred_fallthru
      _
    %p12 = scmp.eq.s32.totalorder 0, 0
    // Predicated region
    $region10: #{tpu_custom_call.1} parent=1 // pred_check
      %p13 = pneg %p12
    $region11: #{tpu_custom_call.1} parent=1 // pred_check_branch
      %15 = sbr.rel (%p13) target = $region13
    $region12: #{tpu_custom_call.1} parent=1 // pred_region
      %vm16 = vcmask 130048
      %17 = vst.msk [vmem:[#allocation2] sm:$0xff] %vm16, 0.0
    $region13: #{tpu_custom_call.1} parent=1 // pred_fallthru
      _
    %v18 = vld [vmem:[#allocation2] sm:$0xff]
    %v19 = vld [vmem:[%s0] sm:$0xff]
    %v20 = vld [vmem:[%s0 + $0x8] sm:$0xff]
    %v21 = vld [vmem:[%s1] sm:$0xff]
    %v22 = vld [vmem:[%s1 + $0x8] sm:$0xff]
    %v23 = vld [vmem:[%s1 + $0x10] sm:$0xff]
    %v24 = vld [vmem:[%s1 + $0x18] sm:$0xff]
    %v25 = vld [vmem:[%s1 + $0x20] sm:$0xff]
    %v26 = vld [vmem:[%s1 + $0x28] sm:$0xff]
    %v27 = vld [vmem:[%s1 + $0x30] sm:$0xff]
    %v28 = vld [vmem:[%s1 + $0x38] sm:$0xff]
    %v29 = vld [vmem:[%s1 + $0x40] sm:$0xff]
    %v30 = vld [vmem:[%s1 + $0x48] sm:$0xff]
    %v31 = vld [vmem:[%s1 + $0x50] sm:$0xff]
    %v32 = vld [vmem:[%s1 + $0x58] sm:$0xff]
    %v33 = vld [vmem:[%s1 + $0x60] sm:$0xff]
    %v34 = vld [vmem:[%s1 + $0x68] sm:$0xff]
    %v35 = vld [vmem:[%s1 + $0x70] sm:$0xff]
    %v36 = vld [vmem:[%s1 + $0x78] sm:$0xff]
    %v37 = vld [vmem:[%s1 + $0x80] sm:$0xff]
    %v38 = vld [vmem:[%s1 + $0x88] sm:$0xff]
    %v39 = vld [vmem:[%s1 + $0x90] sm:$0xff]
    %v40 = vld [vmem:[%s1 + $0x98] sm:$0xff]
    %v41 = vld [vmem:[%s1 + $0xa0] sm:$0xff]
    %v42 = vld [vmem:[%s1 + $0xa8] sm:$0xff]
    %v43 = vld [vmem:[%s1 + $0xb0] sm:$0xff]
    %v44 = vld [vmem:[%s1 + $0xb8] sm:$0xff]
    %v45 = vld [vmem:[%s1 + $0xc0] sm:$0xff]
    %v46 = vld [vmem:[%s1 + $0xc8] sm:$0xff]
    %v47 = vld [vmem:[%s1 + $0xd0] sm:$0xff]
    %v48 = vld [vmem:[%s1 + $0xd8] sm:$0xff]
    %v49 = vld [vmem:[%s1 + $0xe0] sm:$0xff]
    %v50 = vld [vmem:[%s1 + $0xe8] sm:$0xff]
    %v51 = vld [vmem:[%s1 + $0xf0] sm:$0xff]
    %v52 = vld [vmem:[%s1 + $0xf8] sm:$0xff]
    %53 = vmatpush.msra.mxu0 %v36
    %54 = vmatpush.msra.mxu0 %v35
    %55 = vmatpush.msra.mxu0 %v34
    %56 = vmatpush.msra.mxu0 %v33
    %57 = vmatpush.msra.mxu0 %v32
    %58 = vmatpush.msra.mxu0 %v31
    %59 = vmatpush.msra.mxu0 %v30
    %60 = vmatpush.msra.mxu0 %v29
    %61 = vmatpush.msra.mxu0 %v28
    %62 = vmatpush.msra.mxu0 %v27
    %63 = vmatpush.msra.mxu0 %v26
    %64 = vmatpush.msra.mxu0 %v25
    %65 = vmatpush.msra.mxu0 %v24
    %66 = vmatpush.msra.mxu0 %v23
    %67 = vmatpush.msra.mxu0 %v22
    %68 = vmatpush.msra.mxu0 %v21
    %69 = vmatmul.f32.gmra.mxu0 %v19
    %v70 = vpop.f32.mrf.mxu0
    %v71 = vadd.f32 0.0, %v70
    %72 = vdwg.mxu0
    %73 = vmatpush.msra.mxu0 %v52
    %74 = vmatpush.msra.mxu0 %v51
    %75 = vmatpush.msra.mxu0 %v50
    %76 = vmatpush.msra.mxu0 %v49
    %77 = vmatpush.msra.mxu0 %v48
    %78 = vmatpush.msra.mxu0 %v47
    %79 = vmatpush.msra.mxu0 %v46
    %80 = vmatpush.msra.mxu0 %v45
    %81 = vmatpush.msra.mxu0 %v44
    %82 = vmatpush.msra.mxu0 %v43
    %83 = vmatpush.msra.mxu0 %v42
    %84 = vmatpush.msra.mxu0 %v41
    %85 = vmatpush.msra.mxu0 %v40
    %86 = vmatpush.msra.mxu0 %v39
    %87 = vmatpush.msra.mxu0 %v38
    %88 = vmatpush.msra.mxu0 %v37
    %89 = vmatmul.f32.gmra.mxu0 %v20
    %v90 = vpop.f32.mrf.mxu0
    %v91 = vadd.f32 %v71, %v90
    %92 = vdwg.mxu0
    %v93 = vadd.f32 %v18, %v91
    %vm94 = vcmask 130048
    %95 = vst.msk [vmem:[#allocation2] sm:$0xff] %vm94, %v93
    // Predicated region
    $region14: #{tpu_custom_call.1} parent=1 // pred_check
      %p96 = pneg %p12
    $region15: #{tpu_custom_call.1} parent=1 // pred_check_branch
      %98 = sbr.rel (%p96) target = $region17
    $region16: #{tpu_custom_call.1} parent=1 // pred_region
      %v99 = vld [vmem:[#allocation2] sm:$0xff]
      %v100 = vmul.f32 %v99, 0.5
      %101 = vst.msk [vmem:[#allocation3] sm:$0xff] %vm94, %v100
    $region17: #{tpu_custom_call.1} parent=1 // pred_fallthru
      _
    // Predicated region
    $region18: #{tpu_custom_call.1} parent=1 // pred_check
      _
    $region19: #{tpu_custom_call.1} parent=1 // pred_check_branch
      %103 = sbr.rel (0) target = $region21
    $region20: #{tpu_custom_call.1} parent=1 // pred_region
      %105 = vsyncadd [#allocation4], 0
      %s107 = sshll.u32 [#allocation3], 4
      %s108 = int_to_ptr.vmem [resolvable:$true] %s107
      %s109 = sshll.u32 %s2, 4
      %s110 = int_to_ptr.hbm [resolvable:$true] %s109
      %112 = dma.vmem_to_hbm [thread:$0]  %s108, 128, %s110, [#allocation4]
    $region21: #{tpu_custom_call.1} parent=1 // pred_fallthru
      _
    // Predicated region
    $region22: #{tpu_custom_call.1} parent=1 // pred_check
      _
    $region23: #{tpu_custom_call.1} parent=1 // pred_check_branch
      %114 = sbr.rel (0) target = $region25
    $region24: #{tpu_custom_call.1} parent=1 // pred_region
      %116 = dma.done [#allocation4], 128
    $region25: #{tpu_custom_call.1} parent=1 // pred_fallthru
      _
    %117 = vsyncpa [#allocation4], 1

</llo_original>
